<compile_context>
chip_gen: v5e
topology: v5e:2x2
jax: 0.10.0
libtpu: 0.0.40
codegen_flags: <defaults>
</compile_context>

<pallas_src>
import functools

import jax
import jax.numpy as jnp
from jax.experimental import pallas as pl
from jax.experimental.pallas import tpu as pltpu

BN_EPS = 1e-5
LANE = 128
SUBLANE = 8


def _round_up(n, m):
    return (n + m - 1) // m * m


def _bn_one_pass(h, gamma, beta, inv_n):
    """Training-mode BN folded into one reduction pass + one scale/shift."""
    mean = jnp.sum(h, axis=0, keepdims=True) * inv_n
    ex2 = jnp.sum(h * h, axis=0, keepdims=True) * inv_n
    var = ex2 - mean * mean
    scale = gamma * jax.lax.rsqrt(var + BN_EPS)      # rsqrt -> EUP slot
    shift = beta - mean * scale
    return h * scale + shift


def _resnet_block_bn_kernel(x_ref, wa_ref, wb_ref, ga_ref, bta_ref,
                            gb_ref, btb_ref, o_ref, *, n_rows, n_rows_padded):
    x = x_ref[...]                                   # [Bp, Dp] f32
    inv_n = jnp.float32(1.0 / n_rows)

    # fc_a (bias dropped: constant-per-feature cancels under BN mean-subtract)
    h = jnp.dot(x.astype(jnp.bfloat16), wa_ref[...],
                preferred_element_type=jnp.float32)
    h = _bn_one_pass(h, ga_ref[...], bta_ref[...], inv_n)
    h = jnp.maximum(h, 0.0)

    if n_rows_padded > n_rows:
        # Zero padded batch rows so they do not pollute the second BN stats.
        row_ids = jax.lax.broadcasted_iota(jnp.int32, (n_rows_padded, 1), 0)
        h = jnp.where(row_ids < n_rows, h, 0.0)

    # fc_b (bias dropped for the same reason)
    h2 = jnp.dot(h.astype(jnp.bfloat16), wb_ref[...],
                 preferred_element_type=jnp.float32)
    h2 = _bn_one_pass(h2, gb_ref[...], btb_ref[...], inv_n)

    o_ref[...] = h2 + x                              # skip connection


def _resnet_block_kernel(x_ref, wa_ref, ba_ref, wb_ref, bb_ref, o_ref):
    x = x_ref[...]                                   # [Bp, Dp] f32
    h = jnp.dot(x.astype(jnp.bfloat16), wa_ref[...],
                preferred_element_type=jnp.float32) + ba_ref[...]
    h = jnp.maximum(h, 0.0)
    h2 = jnp.dot(h.astype(jnp.bfloat16), wb_ref[...],
                 preferred_element_type=jnp.float32) + bb_ref[...]
    o_ref[...] = h2 + x


def prepare_params(params, *, batch_norm):
    """One-time glue, kept OUT of the per-call path: transpose PyTorch (out,in)
    weights to (in,out), zero-pad the feature dim to a lane-dense multiple of
    128, cast MXU operands to bf16, reshape per-feature vectors to (1, Dp)."""
    wa, ba, wb, bb, ga, bta, gb, btb = params
    d = wa.shape[0]
    dp = _round_up(d, LANE)

    def mat(w):
        wt = jnp.asarray(w, jnp.float32).T
        return jnp.pad(wt, ((0, dp - d), (0, dp - d))).astype(jnp.bfloat16)

    def vec(v):
        return jnp.pad(jnp.asarray(v, jnp.float32), (0, dp - d)).reshape(1, dp)

    if batch_norm:
        # biases ba/bb are mathematically redundant under BN -> not shipped
        return (mat(wa), mat(wb), vec(ga), vec(bta), vec(gb), vec(btb))
    return (mat(wa), vec(ba), mat(wb), vec(bb))


def resnet_block(x, prepped_params, *, batch_norm):
    b, d = x.shape
    bp = _round_up(b, SUBLANE)
    dp = _round_up(d, LANE)

    x_p = jnp.pad(x.astype(jnp.float32), ((0, bp - b), (0, dp - d)))
    ins = (x_p,) + tuple(prepped_params)

    if batch_norm:
        kernel = functools.partial(_resnet_block_bn_kernel,
                                   n_rows=b, n_rows_padded=bp)
    else:
        kernel = _resnet_block_kernel

    # Single grid point: whole (padded) problem is VMEM-resident.
    in_specs = [pl.BlockSpec(a.shape, lambda i: (0, 0)) for a in ins]
    out_spec = pl.BlockSpec((bp, dp), lambda i: (0, 0))

    io_bytes = sum(int(a.size) * a.dtype.itemsize for a in ins) + bp * dp * 4
    vmem_bytes = max(4 << 20, 3 * io_bytes)          # explicit VMEM budget

    out = pl.pallas_call(
        kernel,
        grid=(1,),
        in_specs=in_specs,
        out_specs=out_spec,
        out_shape=jax.ShapeDtypeStruct((bp, dp), jnp.float32),
        compiler_params=pltpu.CompilerParams(
            dimension_semantics=("arbitrary",),
            vmem_limit_bytes=int(vmem_bytes)),
    )(*ins)

    return out[:b, :d]


def init_params(key, resnet_dim):
    """PyTorch-layout params (Linear: U(-1/sqrt(in), 1/sqrt(in)))."""
    k = jax.random.split(key, 4)
    bound = 1.0 / jnp.sqrt(resnet_dim)
    wa = jax.random.uniform(k[0], (resnet_dim, resnet_dim), jnp.float32, -bound, bound)
    ba = jax.random.uniform(k[1], (resnet_dim,), jnp.float32, -bound, bound)
    wb = jax.random.uniform(k[2], (resnet_dim, resnet_dim), jnp.float32, -bound, bound)
    bb = jax.random.uniform(k[3], (resnet_dim,), jnp.float32, -bound, bound)
    ga = jnp.ones((resnet_dim,), jnp.float32)    # batch_norm_a.weight
    bta = jnp.zeros((resnet_dim,), jnp.float32)  # batch_norm_a.bias
    gb = jnp.ones((resnet_dim,), jnp.float32)    # batch_norm_b.weight
    btb = jnp.zeros((resnet_dim,), jnp.float32)  # batch_norm_b.bias
    return (wa, ba, wb, bb, ga, bta, gb, btb)


def reference(x, params, *, batch_norm):
    """Pure-JAX f32 reference mirroring the PyTorch forward."""
    wa, ba, wb, bb, ga, bta, gb, btb = params

    def bn(h, g, b_):
        mean = jnp.mean(h, axis=0, keepdims=True)
        var = jnp.mean((h - mean) ** 2, axis=0, keepdims=True)
        return (h - mean) / jnp.sqrt(var + BN_EPS) * g + b_

    skip = x
    h = x @ wa.T + ba
    if batch_norm:
        h = bn(h, ga, bta)
    h = jnp.maximum(h, 0.0)
    h = h @ wb.T + bb
    if batch_norm:
        h = bn(h, gb, btb)
    return h + skip


if __name__ == "__main__":
    BATCH = 8
    RESNET_DIM = 32

    key = jax.random.PRNGKey(0)
    kx, kp = jax.random.split(key)
    x = jax.random.normal(kx, (BATCH, RESNET_DIM), dtype=jnp.float32)
    params = init_params(kp, RESNET_DIM)

    # bf16 MXU operands (f32 accumulate) -> compare to f32 reference with a
    # bf16-appropriate tolerance.
    for bn_flag in (True, False):
        prepped = prepare_params(params, batch_norm=bn_flag)
        out = jax.block_until_ready(resnet_block(x, prepped, batch_norm=bn_flag))
        ref = reference(x, params, batch_norm=bn_flag)
        assert out.shape == (BATCH, RESNET_DIM)
        assert jnp.allclose(out, ref, atol=5e-2, rtol=5e-2), \
            f"mismatch vs reference (batch_norm={bn_flag})"

    # Ragged batch (B=6) exercises the padded-row masking for BN statistics.
    x6 = x[:6]
    prepped = prepare_params(params, batch_norm=True)
    out6 = jax.block_until_ready(resnet_block(x6, prepped, batch_norm=True))
    ref6 = reference(x6, params, batch_norm=True)
    assert out6.shape == (6, RESNET_DIM)
    assert jnp.allclose(out6, ref6, atol=5e-2, rtol=5e-2), \
        "mismatch vs reference (ragged batch)"

    print("KERNEL_OK")
</pallas_src>

<mosaic_0001>
module attributes {stable_mosaic.version = 11 : i64} {
  func.func @_resnet_block_bn_kernel(%arg0: i32, %arg1: memref<8x128xf32, #tpu.memory_space<vmem>>, %arg2: memref<128x128xbf16, #tpu.memory_space<vmem>>, %arg3: memref<128x128xbf16, #tpu.memory_space<vmem>>, %arg4: memref<1x128xf32, #tpu.memory_space<vmem>>, %arg5: memref<1x128xf32, #tpu.memory_space<vmem>>, %arg6: memref<1x128xf32, #tpu.memory_space<vmem>>, %arg7: memref<1x128xf32, #tpu.memory_space<vmem>>, %arg8: memref<8x128xf32, #tpu.memory_space<vmem>>) attributes {dimension_semantics = [#tpu.dimension_semantics<arbitrary>], iteration_bounds = array<i64: 1>, scalar_prefetch = 0 : i64, scratch_operands = 0 : i64, tpu.core_type = #tpu.core_type<tc>, window_params = [{pipeline_mode = #tpu.pipeline_mode<synchronous>, transform_indices = @transform_0, window_bounds = array<i64: 8, 128>}, {pipeline_mode = #tpu.pipeline_mode<synchronous>, transform_indices = @transform_1, window_bounds = array<i64: 128, 128>}, {pipeline_mode = #tpu.pipeline_mode<synchronous>, transform_indices = @transform_2, window_bounds = array<i64: 128, 128>}, {pipeline_mode = #tpu.pipeline_mode<synchronous>, transform_indices = @transform_3, window_bounds = array<i64: 1, 128>}, {pipeline_mode = #tpu.pipeline_mode<synchronous>, transform_indices = @transform_4, window_bounds = array<i64: 1, 128>}, {pipeline_mode = #tpu.pipeline_mode<synchronous>, transform_indices = @transform_5, window_bounds = array<i64: 1, 128>}, {pipeline_mode = #tpu.pipeline_mode<synchronous>, transform_indices = @transform_6, window_bounds = array<i64: 1, 128>}, {pipeline_mode = #tpu.pipeline_mode<synchronous>, transform_indices = @transform_7, window_bounds = array<i64: 8, 128>}]} {
    %c0 = arith.constant 0 : index
    %c0_0 = arith.constant 0 : index
    %0 = vector.load %arg1[%c0, %c0_0] : memref<8x128xf32, #tpu.memory_space<vmem>>, vector<8x128xf32>
    %1 = arith.truncf %0 : vector<8x128xf32> to vector<8x128xbf16>
    %c0_1 = arith.constant 0 : index
    %c0_2 = arith.constant 0 : index
    %2 = vector.load %arg2[%c0_1, %c0_2] : memref<128x128xbf16, #tpu.memory_space<vmem>>, vector<128x128xbf16>
    %cst = arith.constant dense<0.000000e+00> : vector<8x128xf32>
    %3 = tpu.matmul %1, %2, %cst {dimension_numbers = #tpu.dot_dimension_numbers<[1], [0], [0], [1], [0, 0, 1, 1], [], []>} : vector<8x128xbf16>, vector<128x128xbf16>, vector<8x128xf32> -> vector<8x128xf32>
    %c0_3 = arith.constant 0 : index
    %c0_4 = arith.constant 0 : index
    %4 = vector.load %arg4[%c0_3, %c0_4] : memref<1x128xf32, #tpu.memory_space<vmem>>, vector<1x128xf32>
    %c0_5 = arith.constant 0 : index
    %c0_6 = arith.constant 0 : index
    %5 = vector.load %arg5[%c0_5, %c0_6] : memref<1x128xf32, #tpu.memory_space<vmem>>, vector<1x128xf32>
    %cst_7 = arith.constant dense<0.000000e+00> : vector<128xf32>
    %6 = vector.multi_reduction <add>, %3, %cst_7 [0] : vector<8x128xf32> to vector<128xf32>
    %7 = vector.shape_cast %6 : vector<128xf32> to vector<1x128xf32>
    %cst_8 = arith.constant 1.250000e-01 : f32
    %8 = vector.broadcast %cst_8 : f32 to vector<1x128xf32>
    %9 = arith.mulf %7, %8 : vector<1x128xf32>
    %10 = arith.mulf %3, %3 : vector<8x128xf32>
    %cst_9 = arith.constant dense<0.000000e+00> : vector<128xf32>
    %11 = vector.multi_reduction <add>, %10, %cst_9 [0] : vector<8x128xf32> to vector<128xf32>
    %12 = vector.shape_cast %11 : vector<128xf32> to vector<1x128xf32>
    %cst_10 = arith.constant 1.250000e-01 : f32
    %13 = vector.broadcast %cst_10 : f32 to vector<1x128xf32>
    %14 = arith.mulf %12, %13 : vector<1x128xf32>
    %15 = arith.mulf %9, %9 : vector<1x128xf32>
    %16 = arith.subf %14, %15 : vector<1x128xf32>
    %cst_11 = arith.constant 9.99999974E-6 : f32
    %17 = vector.broadcast %cst_11 : f32 to vector<1x128xf32>
    %18 = arith.addf %16, %17 : vector<1x128xf32>
    %19 = math.rsqrt %18 : vector<1x128xf32>
    %20 = arith.mulf %4, %19 : vector<1x128xf32>
    %21 = arith.mulf %9, %20 : vector<1x128xf32>
    %22 = arith.subf %5, %21 : vector<1x128xf32>
    %23 = vector.broadcast %20 : vector<1x128xf32> to vector<8x128xf32>
    %24 = arith.mulf %3, %23 : vector<8x128xf32>
    %25 = vector.broadcast %22 : vector<1x128xf32> to vector<8x128xf32>
    %26 = arith.addf %24, %25 : vector<8x128xf32>
    %cst_12 = arith.constant 0.000000e+00 : f32
    %27 = vector.broadcast %cst_12 : f32 to vector<8x128xf32>
    %28 = arith.maximumf %26, %27 : vector<8x128xf32>
    %29 = arith.truncf %28 : vector<8x128xf32> to vector<8x128xbf16>
    %c0_13 = arith.constant 0 : index
    %c0_14 = arith.constant 0 : index
    %30 = vector.load %arg3[%c0_13, %c0_14] : memref<128x128xbf16, #tpu.memory_space<vmem>>, vector<128x128xbf16>
    %cst_15 = arith.constant dense<0.000000e+00> : vector<8x128xf32>
    %31 = tpu.matmul %29, %30, %cst_15 {dimension_numbers = #tpu.dot_dimension_numbers<[1], [0], [0], [1], [0, 0, 1, 1], [], []>} : vector<8x128xbf16>, vector<128x128xbf16>, vector<8x128xf32> -> vector<8x128xf32>
    %c0_16 = arith.constant 0 : index
    %c0_17 = arith.constant 0 : index
    %32 = vector.load %arg6[%c0_16, %c0_17] : memref<1x128xf32, #tpu.memory_space<vmem>>, vector<1x128xf32>
    %c0_18 = arith.constant 0 : index
    %c0_19 = arith.constant 0 : index
    %33 = vector.load %arg7[%c0_18, %c0_19] : memref<1x128xf32, #tpu.memory_space<vmem>>, vector<1x128xf32>
    %cst_20 = arith.constant dense<0.000000e+00> : vector<128xf32>
    %34 = vector.multi_reduction <add>, %31, %cst_20 [0] : vector<8x128xf32> to vector<128xf32>
    %35 = vector.shape_cast %34 : vector<128xf32> to vector<1x128xf32>
    %cst_21 = arith.constant 1.250000e-01 : f32
    %36 = vector.broadcast %cst_21 : f32 to vector<1x128xf32>
    %37 = arith.mulf %35, %36 : vector<1x128xf32>
    %38 = arith.mulf %31, %31 : vector<8x128xf32>
    %cst_22 = arith.constant dense<0.000000e+00> : vector<128xf32>
    %39 = vector.multi_reduction <add>, %38, %cst_22 [0] : vector<8x128xf32> to vector<128xf32>
    %40 = vector.shape_cast %39 : vector<128xf32> to vector<1x128xf32>
    %cst_23 = arith.constant 1.250000e-01 : f32
    %41 = vector.broadcast %cst_23 : f32 to vector<1x128xf32>
    %42 = arith.mulf %40, %41 : vector<1x128xf32>
    %43 = arith.mulf %37, %37 : vector<1x128xf32>
    %44 = arith.subf %42, %43 : vector<1x128xf32>
    %cst_24 = arith.constant 9.99999974E-6 : f32
    %45 = vector.broadcast %cst_24 : f32 to vector<1x128xf32>
    %46 = arith.addf %44, %45 : vector<1x128xf32>
    %47 = math.rsqrt %46 : vector<1x128xf32>
    %48 = arith.mulf %32, %47 : vector<1x128xf32>
    %49 = arith.mulf %37, %48 : vector<1x128xf32>
    %50 = arith.subf %33, %49 : vector<1x128xf32>
    %51 = vector.broadcast %48 : vector<1x128xf32> to vector<8x128xf32>
    %52 = arith.mulf %31, %51 : vector<8x128xf32>
    %53 = vector.broadcast %50 : vector<1x128xf32> to vector<8x128xf32>
    %54 = arith.addf %52, %53 : vector<8x128xf32>
    %55 = arith.addf %54, %0 : vector<8x128xf32>
    %c0_25 = arith.constant 0 : index
    %c0_26 = arith.constant 0 : index
    %56 = vector.load %arg8[%c0_25, %c0_26] : memref<8x128xf32, #tpu.memory_space<vmem>>, vector<8x128xf32>
    tpu.vector_store %arg8[%c0_25, %c0_26], %55 {strides = array<i32>} : memref<8x128xf32, #tpu.memory_space<vmem>>, vector<8x128xf32>,
    return
  }
  func.func @transform_0(%arg0: i32) -> (i32, i32) {
    %c0_i32 = arith.constant 0 : i32
    %c0_i32_0 = arith.constant 0 : i32
    %c0_i32_1 = arith.constant 0 : i32
    return %c0_i32, %c0_i32_0 : i32, i32
  }
  func.func @transform_1(%arg0: i32) -> (i32, i32) {
    %c0_i32 = arith.constant 0 : i32
    %c0_i32_0 = arith.constant 0 : i32
    %c0_i32_1 = arith.constant 0 : i32
    return %c0_i32, %c0_i32_0 : i32, i32
  }
  func.func @transform_2(%arg0: i32) -> (i32, i32) {
    %c0_i32 = arith.constant 0 : i32
    %c0_i32_0 = arith.constant 0 : i32
    %c0_i32_1 = arith.constant 0 : i32
    return %c0_i32, %c0_i32_0 : i32, i32
  }
  func.func @transform_3(%arg0: i32) -> (i32, i32) {
    %c0_i32 = arith.constant 0 : i32
    %c0_i32_0 = arith.constant 0 : i32
    %c0_i32_1 = arith.constant 0 : i32
    return %c0_i32, %c0_i32_0 : i32, i32
  }
  func.func @transform_4(%arg0: i32) -> (i32, i32) {
    %c0_i32 = arith.constant 0 : i32
    %c0_i32_0 = arith.constant 0 : i32
    %c0_i32_1 = arith.constant 0 : i32
    return %c0_i32, %c0_i32_0 : i32, i32
  }
  func.func @transform_5(%arg0: i32) -> (i32, i32) {
    %c0_i32 = arith.constant 0 : i32
    %c0_i32_0 = arith.constant 0 : i32
    %c0_i32_1 = arith.constant 0 : i32
    return %c0_i32, %c0_i32_0 : i32, i32
  }
  func.func @transform_6(%arg0: i32) -> (i32, i32) {
    %c0_i32 = arith.constant 0 : i32
    %c0_i32_0 = arith.constant 0 : i32
    %c0_i32_1 = arith.constant 0 : i32
    return %c0_i32, %c0_i32_0 : i32, i32
  }
  func.func @transform_7(%arg0: i32) -> (i32, i32) {
    %c0_i32 = arith.constant 0 : i32
    %c0_i32_0 = arith.constant 0 : i32
    %c0_i32_1 = arith.constant 0 : i32
    return %c0_i32, %c0_i32_0 : i32, i32
  }
}

</mosaic_0001>

<llo_original>
// kernel: tpu_custom_call.1
$region0: #{tpu_custom_call.1}
  #allocation0 [shape = 'u32[]', space=smem, size = 0x4, offset = 0x4, fixed_abs, tag = 'smem constant byte address 0x4 - core index']
  #allocation1 [shape = 'u32[72,128]{1,0:T(1,128)}', space=vmem, size = 0x9000, scoped, tag = 'internal scratch']
  %s0 = inlined_call_operand.hbm [shape: f32[8,128], index: 0, kind: input, shape index: {}]
  %s1 = inlined_call_operand.hbm [shape: bf16[128,128], index: 1, kind: input, shape index: {}]
  %s2 = inlined_call_operand.hbm [shape: bf16[128,128], index: 2, kind: input, shape index: {}]
  %s3 = inlined_call_operand.vmem [shape: f32[1,128], index: 3, kind: input, shape index: {}]
  %s4 = inlined_call_operand.vmem [shape: f32[1,128], index: 4, kind: input, shape index: {}]
  %s5 = inlined_call_operand.vmem [shape: f32[1,128], index: 5, kind: input, shape index: {}]
  %s6 = inlined_call_operand.vmem [shape: f32[1,128], index: 6, kind: input, shape index: {}]
  %s7 = inlined_call_operand.hbm [shape: f32[8,128], index: 7, kind: output, shape index: {}]
  %s8 = sld [smem:[#allocation0]]
  $region50: #{tpu_custom_call.1} parent=0
    _
  %s10 = ssub.s32 1, %s8
  %s11 = scalar_select 0, %s10, %s8
  $region1: #{tpu_custom_call.1} parent=0
    #allocation2 [shape = 'u8[4096]{0}', space=vmem, size = 0x1000, scoped, tag = 'input window, operand 0, single buffered']
    #allocation3 [shape = 's32[1]{0}', space=sflag, size = 0x4, scoped, tag = 'scoped memory for tpu_custom_call.1']
    #allocation4 [shape = 's32[1]{0}', space=sflag, size = 0x4, scoped, tag = 'scoped memory for tpu_custom_call.1']
    #allocation5 [shape = 'u8[32768]{0}', space=vmem, size = 0x8000, scoped, tag = 'input window, operand 1, single buffered']
    #allocation6 [shape = 's32[1]{0}', space=sflag, size = 0x4, scoped, tag = 'scoped memory for tpu_custom_call.1']
    #allocation7 [shape = 'u8[32768]{0}', space=vmem, size = 0x8000, scoped, tag = 'input window, operand 2, single buffered']
    #allocation8 [shape = 'u8[4096]{0}', space=vmem, size = 0x1000, scoped, tag = 'output window, operand 0, single buffered']
    %12 = vsyncpa [#allocation3], 0
    %13 = vsyncpa [#allocation6], 0
    %14 = vsyncpa [#allocation4], 0
    // Predicated region
    $region2: #{tpu_custom_call.1} parent=1 // pred_check
      _
    $region3: #{tpu_custom_call.1} parent=1 // pred_check_branch
      %16 = sbr.rel (0) target = $region5
    $region4: #{tpu_custom_call.1} parent=1 // pred_region
      %18 = vsyncadd [#allocation3], 0
      %s20 = sshll.u32 %s0, 4
      %s21 = int_to_ptr.hbm [resolvable:$true] %s20
      %s22 = sshll.u32 [#allocation2], 4
      %s23 = int_to_ptr.vmem [resolvable:$true] %s22
      %25 = dma.hbm_to_vmem [thread:$0]  %s21, 128, %s23, [#allocation3]
    $region5: #{tpu_custom_call.1} parent=1 // pred_fallthru
      _
    // Predicated region
    $region6: #{tpu_custom_call.1} parent=1 // pred_check
      _
    $region7: #{tpu_custom_call.1} parent=1 // pred_check_branch
      %27 = sbr.rel (0) target = $region9
    $region8: #{tpu_custom_call.1} parent=1 // pred_region
      %29 = vsyncadd [#allocation6], 0
      %s30 = sshll.u32 %s1, 4
      %s31 = int_to_ptr.hbm [resolvable:$true] %s30
      %s32 = sshll.u32 [#allocation5], 4
      %s33 = int_to_ptr.vmem [resolvable:$true] %s32
      %38 = dma.hbm_to_vmem [thread:$0]  %s31, 1024, %s33, [#allocation6], 64, 64, 4
    $region9: #{tpu_custom_call.1} parent=1 // pred_fallthru
      _
    // Predicated region
    $region10: #{tpu_custom_call.1} parent=1 // pred_check
      _
    $region11: #{tpu_custom_call.1} parent=1 // pred_check_branch
      %40 = sbr.rel (0) target = $region13
    $region12: #{tpu_custom_call.1} parent=1 // pred_region
      %42 = vsyncadd [#allocation6], 0
      %s43 = sshll.u32 %s2, 4
      %s44 = int_to_ptr.hbm [resolvable:$true] %s43
      %s45 = sshll.u32 [#allocation7], 4
      %s46 = int_to_ptr.vmem [resolvable:$true] %s45
      %51 = dma.hbm_to_vmem [thread:$0]  %s44, 1024, %s46, [#allocation6], 64, 64, 4
    $region13: #{tpu_custom_call.1} parent=1 // pred_fallthru
      _
    // Predicated region
    $region14: #{tpu_custom_call.1} parent=1 // pred_check
      _
    $region15: #{tpu_custom_call.1} parent=1 // pred_check_branch
      %53 = sbr.rel (0) target = $region17
    $region16: #{tpu_custom_call.1} parent=1 // pred_region
      _
    $region17: #{tpu_custom_call.1} parent=1 // pred_fallthru
      _
    // Predicated region
    $region18: #{tpu_custom_call.1} parent=1 // pred_check
      _
    $region19: #{tpu_custom_call.1} parent=1 // pred_check_branch
      %55 = sbr.rel (0) target = $region21
    $region20: #{tpu_custom_call.1} parent=1 // pred_region
      _
    $region21: #{tpu_custom_call.1} parent=1 // pred_fallthru
      _
    // Predicated region
    $region22: #{tpu_custom_call.1} parent=1 // pred_check
      _
    $region23: #{tpu_custom_call.1} parent=1 // pred_check_branch
      %57 = sbr.rel (0) target = $region25
    $region24: #{tpu_custom_call.1} parent=1 // pred_region
      _
    $region25: #{tpu_custom_call.1} parent=1 // pred_fallthru
      _
    // Predicated region
    $region26: #{tpu_custom_call.1} parent=1 // pred_check
      _
    $region27: #{tpu_custom_call.1} parent=1 // pred_check_branch
      %59 = sbr.rel (0) target = $region29
    $region28: #{tpu_custom_call.1} parent=1 // pred_region
      _
    $region29: #{tpu_custom_call.1} parent=1 // pred_fallthru
      _
    // Predicated region
    $region30: #{tpu_custom_call.1} parent=1 // pred_check
      _
    $region31: #{tpu_custom_call.1} parent=1 // pred_check_branch
      %61 = sbr.rel (0) target = $region33
    $region32: #{tpu_custom_call.1} parent=1 // pred_region
      %63 = dma.done [#allocation3], 128
    $region33: #{tpu_custom_call.1} parent=1 // pred_fallthru
      _
    // Predicated region
    $region34: #{tpu_custom_call.1} parent=1 // pred_check
      _
    $region35: #{tpu_custom_call.1} parent=1 // pred_check_branch
      %65 = sbr.rel (0) target = $region37
    $region36: #{tpu_custom_call.1} parent=1 // pred_region
      %67 = dma.done [#allocation6], 1024
    $region37: #{tpu_custom_call.1} parent=1 // pred_fallthru
      _
    // Predicated region
    $region38: #{tpu_custom_call.1} parent=1 // pred_check
      _
    $region39: #{tpu_custom_call.1} parent=1 // pred_check_branch
      %69 = sbr.rel (0) target = $region41
    $region40: #{tpu_custom_call.1} parent=1 // pred_region
      %71 = dma.done [#allocation6], 1024
    $region41: #{tpu_custom_call.1} parent=1 // pred_fallthru
      _
    %v72 = vld [vmem:[#allocation2] sm:$0xff]
    %v73 = vpack.c.bf16 %v72, %v72
    %v74 = vld [vmem:[#allocation5] sm:$0xf]
    %v75 = vld [vmem:[#allocation5 + $0x4] sm:$0xf]
    %v76 = vld [vmem:[#allocation5 + $0x8] sm:$0xf]
    %v77 = vld [vmem:[#allocation5 + $0xc] sm:$0xf]
    %v78 = vld [vmem:[#allocation5 + $0x10] sm:$0xf]
    %v79 = vld [vmem:[#allocation5 + $0x14] sm:$0xf]
    %v80 = vld [vmem:[#allocation5 + $0x18] sm:$0xf]
    %v81 = vld [vmem:[#allocation5 + $0x1c] sm:$0xf]
    %v82 = vld [vmem:[#allocation5 + $0x20] sm:$0xf]
    %v83 = vld [vmem:[#allocation5 + $0x24] sm:$0xf]
    %v84 = vld [vmem:[#allocation5 + $0x28] sm:$0xf]
    %v85 = vld [vmem:[#allocation5 + $0x2c] sm:$0xf]
    %v86 = vld [vmem:[#allocation5 + $0x30] sm:$0xf]
    %v87 = vld [vmem:[#allocation5 + $0x34] sm:$0xf]
    %v88 = vld [vmem:[#allocation5 + $0x38] sm:$0xf]
    %v89 = vld [vmem:[#allocation5 + $0x3c] sm:$0xf]
    %v106 = vunpack.c.l.b16 %v74
    %v107 = vunpack.c.l.b16 %v75
    %v108 = vunpack.c.l.b16 %v76
    %v109 = vunpack.c.l.b16 %v77
    %v110 = vunpack.c.l.b16 %v78
    %v111 = vunpack.c.l.b16 %v79
    %v112 = vunpack.c.l.b16 %v80
    %v113 = vunpack.c.l.b16 %v81
    %v114 = vunpack.c.l.b16 %v82
    %v115 = vunpack.c.l.b16 %v83
    %v116 = vunpack.c.l.b16 %v84
    %v117 = vunpack.c.l.b16 %v85
    %v118 = vunpack.c.l.b16 %v86
    %v119 = vunpack.c.l.b16 %v87
    %v120 = vunpack.c.l.b16 %v88
    %v121 = vunpack.c.l.b16 %v89
    %v122 = vpack.c.b16 %v107, %v106
    %v123 = vpack.c.b16 %v109, %v108
    %v124 = vpack.c.b16 %v111, %v110
    %v125 = vpack.c.b16 %v113, %v112
    %v126 = vpack.c.b16 %v115, %v114
    %v127 = vpack.c.b16 %v117, %v116
    %v128 = vpack.c.b16 %v119, %v118
    %v129 = vpack.c.b16 %v121, %v120
    %138 = vmatpush.bf16.msra.mxu0 %v129
    %139 = vmatpush.bf16.msra.mxu0 %v128
    %140 = vmatpush.bf16.msra.mxu0 %v127
    %141 = vmatpush.bf16.msra.mxu0 %v126
    %142 = vmatpush.bf16.msra.mxu0 %v125
    %143 = vmatpush.bf16.msra.mxu0 %v124
    %144 = vmatpush.bf16.msra.mxu0 %v123
    %145 = vmatpush.bf16.msra.mxu0 %v122
    %146 = vmatmul.bf16.gmra.mxu0 %v73
    %v147 = vpop.f32.mrf.mxu0
    %v148 = vadd.f32 0.0, %v147
    %v149 = vpop.f32.mrf.mxu0
    %150 = vdwg.mxu0
    %v151 = vld [vmem:[%s3] sm:$0x1]
    %v152 = vld [vmem:[%s4] sm:$0x1]
    %v153 = vrot.slane %v148, 4
    %v154 = vadd.f32 %v148, %v153
    %v155 = vrot.slane %v154, 2
    %v156 = vadd.f32 %v154, %v155
    %v157 = vrot.slane %v156, 1
    %v158 = vadd.f32 %v156, %v157
    %v159 = vmul.f32 %v158, 0.125
    %v160 = vmul.f32 %v148, %v148
    %v161 = vrot.slane %v160, 4
    %v162 = vadd.f32 %v160, %v161
    %v163 = vrot.slane %v162, 2
    %v164 = vadd.f32 %v162, %v163
    %v165 = vrot.slane %v164, 1
    %v166 = vadd.f32 %v164, %v165
    %v167 = vmul.f32 %v166, 0.125
    %v168 = vmul.f32 %v159, %v159
    %v169 = vsub.f32 %v167, %v168
    %v170 = vadd.f32 %v169, 1e-05
    %v171 = vrsqrt.pop %v170
    %v172 = vmul.f32 %v171, %v170
    %v173 = vmul.f32 %v172, %v171
    %v174 = vmul.f32 0.5, %v173
    %v175 = vsub.f32 1.5, %v174
    %v176 = vmul.f32 %v171, %v175
    %vm177 = vweird.f32 %v170
    %vm178 = vweird.f32 %v171
    %vm179 = vmor %vm177, %vm178
    %v180 = vsel %vm179, %v171, %v176
    %v181 = vmul.f32 %v151, %v180
    %v182 = vmul.f32 %v159, %v181
    %v183 = vsub.f32 %v152, %v182
    %v185 = vperm.slane %v181, 0
    %v187 = vmul.f32 %v148, %v185
    %v189 = vperm.slane %v183, 0
    %v191 = vadd.f32 %v187, %v189
    %v192 = vmax.f32 %v191, 0.0
    %v193 = vpack.c.bf16 %v192, %v192
    %v194 = vld [vmem:[#allocation7] sm:$0xf]
    %v195 = vld [vmem:[#allocation7 + $0x4] sm:$0xf]
    %v196 = vld [vmem:[#allocation7 + $0x8] sm:$0xf]
    %v197 = vld [vmem:[#allocation7 + $0xc] sm:$0xf]
    %v198 = vld [vmem:[#allocation7 + $0x10] sm:$0xf]
    %v199 = vld [vmem:[#allocation7 + $0x14] sm:$0xf]
    %v200 = vld [vmem:[#allocation7 + $0x18] sm:$0xf]
    %v201 = vld [vmem:[#allocation7 + $0x1c] sm:$0xf]
    %v202 = vld [vmem:[#allocation7 + $0x20] sm:$0xf]
    %v203 = vld [vmem:[#allocation7 + $0x24] sm:$0xf]
    %v204 = vld [vmem:[#allocation7 + $0x28] sm:$0xf]
    %v205 = vld [vmem:[#allocation7 + $0x2c] sm:$0xf]
    %v206 = vld [vmem:[#allocation7 + $0x30] sm:$0xf]
    %v207 = vld [vmem:[#allocation7 + $0x34] sm:$0xf]
    %v208 = vld [vmem:[#allocation7 + $0x38] sm:$0xf]
    %v209 = vld [vmem:[#allocation7 + $0x3c] sm:$0xf]
    %v226 = vunpack.c.l.b16 %v194
    %v227 = vunpack.c.l.b16 %v195
    %v228 = vunpack.c.l.b16 %v196
    %v229 = vunpack.c.l.b16 %v197
    %v230 = vunpack.c.l.b16 %v198
    %v231 = vunpack.c.l.b16 %v199
    %v232 = vunpack.c.l.b16 %v200
    %v233 = vunpack.c.l.b16 %v201
    %v234 = vunpack.c.l.b16 %v202
    %v235 = vunpack.c.l.b16 %v203
    %v236 = vunpack.c.l.b16 %v204
    %v237 = vunpack.c.l.b16 %v205
    %v238 = vunpack.c.l.b16 %v206
    %v239 = vunpack.c.l.b16 %v207
    %v240 = vunpack.c.l.b16 %v208
    %v241 = vunpack.c.l.b16 %v209
    %v242 = vpack.c.b16 %v227, %v226
    %v243 = vpack.c.b16 %v229, %v228
    %v244 = vpack.c.b16 %v231, %v230
    %v245 = vpack.c.b16 %v233, %v232
    %v246 = vpack.c.b16 %v235, %v234
    %v247 = vpack.c.b16 %v237, %v236
    %v248 = vpack.c.b16 %v239, %v238
    %v249 = vpack.c.b16 %v241, %v240
    %258 = vmatpush.bf16.msra.mxu0 %v249
    %259 = vmatpush.bf16.msra.mxu0 %v248
    %260 = vmatpush.bf16.msra.mxu0 %v247
    %261 = vmatpush.bf16.msra.mxu0 %v246
    %262 = vmatpush.bf16.msra.mxu0 %v245
    %263 = vmatpush.bf16.msra.mxu0 %v244
    %264 = vmatpush.bf16.msra.mxu0 %v243
    %265 = vmatpush.bf16.msra.mxu0 %v242
    %266 = vmatmul.bf16.gmra.mxu0 %v193
    %v267 = vpop.f32.mrf.mxu0
    %v268 = vadd.f32 0.0, %v267
    %v269 = vpop.f32.mrf.mxu0
    %270 = vdwg.mxu0
    %v271 = vld [vmem:[%s5] sm:$0x1]
    %v272 = vld [vmem:[%s6] sm:$0x1]
    %v273 = vrot.slane %v268, 4
    %v274 = vadd.f32 %v268, %v273
    %v275 = vrot.slane %v274, 2
    %v276 = vadd.f32 %v274, %v275
    %v277 = vrot.slane %v276, 1
    %v278 = vadd.f32 %v276, %v277
    %v279 = vmul.f32 %v278, 0.125
    %v280 = vmul.f32 %v268, %v268
    %v281 = vrot.slane %v280, 4
    %v282 = vadd.f32 %v280, %v281
    %v283 = vrot.slane %v282, 2
    %v284 = vadd.f32 %v282, %v283
    %v285 = vrot.slane %v284, 1
    %v286 = vadd.f32 %v284, %v285
    %v287 = vmul.f32 %v286, 0.125
    %v288 = vmul.f32 %v279, %v279
    %v289 = vsub.f32 %v287, %v288
    %v290 = vadd.f32 %v289, 1e-05
    %v291 = vrsqrt.pop %v290
    %v292 = vmul.f32 %v291, %v290
    %v293 = vmul.f32 %v292, %v291
    %v294 = vmul.f32 0.5, %v293
    %v295 = vsub.f32 1.5, %v294
    %v296 = vmul.f32 %v291, %v295
    %vm297 = vweird.f32 %v290
    %vm298 = vweird.f32 %v291
    %vm299 = vmor %vm297, %vm298
    %v300 = vsel %vm299, %v291, %v296
    %v301 = vmul.f32 %v271, %v300
    %v302 = vmul.f32 %v279, %v301
    %v303 = vsub.f32 %v272, %v302
    %v305 = vperm.slane %v301, 0
    %v307 = vmul.f32 %v268, %v305
    %v309 = vperm.slane %v303, 0
    %v311 = vadd.f32 %v307, %v309
    %v312 = vadd.f32 %v311, %v72
    %313 = vst [vmem:[#allocation8] sm:$0xff] %v312
    // Predicated region
    $region42: #{tpu_custom_call.1} parent=1 // pred_check
      _
    $region43: #{tpu_custom_call.1} parent=1 // pred_check_branch
      %315 = sbr.rel (0) target = $region45
    $region44: #{tpu_custom_call.1} parent=1 // pred_region
      %317 = vsyncadd [#allocation4], 0
      %s319 = sshll.u32 [#allocation8], 4
      %s320 = int_to_ptr.vmem [resolvable:$true] %s319
      %s321 = sshll.u32 %s7, 4
      %s322 = int_to_ptr.hbm [resolvable:$true] %s321
      %324 = dma.vmem_to_hbm [thread:$0]  %s320, 128, %s322, [#allocation4]
    $region45: #{tpu_custom_call.1} parent=1 // pred_fallthru
      _
    // Predicated region
    $region46: #{tpu_custom_call.1} parent=1 // pred_check
      _
    $region47: #{tpu_custom_call.1} parent=1 // pred_check_branch
      %326 = sbr.rel (0) target = $region49
    $region48: #{tpu_custom_call.1} parent=1 // pred_region
      %328 = dma.done [#allocation4], 128
    $region49: #{tpu_custom_call.1} parent=1 // pred_fallthru
      _
    %329 = vsyncpa [#allocation3], 1
    %330 = vsyncpa [#allocation6], 1
    %331 = vsyncpa [#allocation4], 1

</llo_original>
